<compile_context>
chip_gen: v6e
topology: v6e:2x2x1
jax: 0.10.0
libtpu: 0.0.40
codegen_flags: <defaults>
</compile_context>

<pallas_src>
import functools

import jax
import jax.numpy as jnp
from jax.experimental import pallas as pl
from jax.experimental.pallas import tpu as pltpu


def _round_up(a, b):
    return -(-a // b) * b


def gin_kernel(x_ref, wpack_ref, b1_ref, w2tp_ref, b2_ref, o_ref, *,
               fin_pad, compute_dtype):
    """One row-tile of  y = x@W2^T + relu(x@W1^T + b1)@W2^T + b2.

    x_ref:     (tm, Fin)             native dtype (cast to bf16 in-kernel)
    wpack_ref: (Fin, fin_pad + Fout) compute dtype == [W1^T | 0-pad | W2^T]
    b1_ref:    (1, fin_pad)          f32 (zeros in the padded lanes)
    w2tp_ref:  (fin_pad, Fout)       compute dtype (zero rows beyond Fin)
    b2_ref:    (1, Fout)             f32
    o_ref:     (tm, Fout)
    """
    # In-kernel cast: x travels HBM->VMEM in its native dtype; the per-tile VPU
    # cast is hidden under the DMA (no extra wrapper-side HBM pass).
    x = x_ref[...].astype(compute_dtype)

    # One wide MXU pass: p = [x@W1^T | x@W2^T], f32 accumulation.  fin_pad is a
    # multiple of 128, so both slices below are vreg-boundary aligned.
    p = jnp.dot(x, wpack_ref[...], preferred_element_type=jnp.float32)
    p1 = p[:, :fin_pad]       # x @ W1^T (exact zeros in padded lanes)
    p2 = p[:, fin_pad:]       # x @ W2^T

    # b1's padded lanes are zero => relu keeps h's padded lanes at zero, and
    # w2tp's padded rows are zero, so the padded-K second matmul is exact.
    # Elementwise math stays in f32 (v5e has no bf16 VPU).
    h = jnp.maximum(p1 + b1_ref[...], 0.0)

    # Folded residual: (x + h)@W2^T = p2 + h@W2^T.
    y = p2 + jnp.dot(h.astype(compute_dtype), w2tp_ref[...],
                     preferred_element_type=jnp.float32) + b2_ref[...]

    # TODO(synk): on v7x (3.2 TB/s HBM) the Fout=16 masked stores become the
    # binding slot; repack (tm, Fout) -> (tm*Fout//128, 128) here with a
    # lane-dense out_spec once Mosaic's reshape relayout is verified for it.
    o_ref[...] = y.astype(o_ref.dtype)


def _choose_tm(n_rows, bytes_per_row, *, max_tm=8192, target_step_bytes=1 << 20,
               min_steps_large=4, large_n_threshold=4096):
    """Row tile sized so each grid step moves ~target_step_bytes of x+out.

    Large tiles amortize the ~0.35us fixed per-grid-step pipeline overhead (the
    op is step-overhead/HBM bound at small feature widths).  For large N we
    keep at least `min_steps_large` steps so the "parallel" axis can shard
    across both v7x TensorCores (neutral on single-TC v5e/v6e).  N need not be
    divisible by the tile: the grid uses pl.cdiv and the tail block is masked.
    """
    tm = min(max_tm, max(256, target_step_bytes // max(bytes_per_row, 1)))
    if n_rows >= large_n_threshold:
        tm = min(tm, _round_up(pl.cdiv(n_rows, min_steps_large), 8))
    if tm >= n_rows:
        return n_rows                    # one step; block == full array (always legal)
    return max(8, (tm // 8) * 8)         # (8,128) second-minor rule for tiled rows


def gin_forward(x, w1, b1, w2, b2, *, tm=None, compute_dtype=jnp.bfloat16,
                out_dtype=None):
    """Fused GIN block: lin_2(x + relu(lin_1(x))).

    x:  (N, Fin)
    w1: (Fin, Fin), b1: (Fin,)    -- PyTorch nn.Linear layout (out, in)
    w2: (Fout, Fin), b2: (Fout,)
    Returns (N, Fout) in `out_dtype` (default x.dtype; pass jnp.bfloat16 to
    halve output writeback if downstream tolerates it).
    """
    N, Fin = x.shape
    Fout, Fin2 = w2.shape
    assert Fin2 == Fin and w1.shape == (Fin, Fin)
    out_dtype = x.dtype if out_dtype is None else out_dtype

    # Lane-aligned packed RHS: W1^T zero-padded to a 128-lane multiple so that
    # in-kernel slices of the product land on vreg boundaries.  (On v5e's
    # 128-wide MXU the pad costs one extra pass -- negligible at these K.)
    fin_pad = _round_up(Fin, 128)
    w1_t = jnp.zeros((Fin, fin_pad), compute_dtype).at[:, :Fin].set(
        jnp.asarray(w1, jnp.float32).T.astype(compute_dtype))
    w2_t = jnp.asarray(w2, jnp.float32).T.astype(compute_dtype)        # (Fin, Fout)
    w_pack = jnp.concatenate([w1_t, w2_t], axis=1)                     # (Fin, fin_pad+Fout)
    # Zero-row-padded W2^T for the second matmul (K = fin_pad).  A tiny
    # grid-invariant duplicate (fin_pad*Fout*2 B) that stays VMEM-resident.
    w2_tp = jnp.zeros((fin_pad, Fout), compute_dtype).at[:Fin, :].set(w2_t)
    b1_row = jnp.zeros((1, fin_pad), jnp.float32).at[0, :Fin].set(
        jnp.asarray(b1, jnp.float32))
    b2_row = jnp.asarray(b2, jnp.float32).reshape(1, Fout)

    x_bytes = jnp.dtype(x.dtype).itemsize
    o_bytes = jnp.dtype(out_dtype).itemsize
    bytes_per_row = Fin * x_bytes + Fout * o_bytes
    if tm is None:
        tm = _choose_tm(N, bytes_per_row)
    assert tm == N or tm % 8 == 0, "row tile must be a multiple of 8 (or == N)"
    grid = (pl.cdiv(N, tm),)

    # Generation-aware scoped-VMEM budget: double-buffered x/out tiles plus the
    # resident weights/biases, with headroom, capped at 3/4 of physical VMEM
    # (v7x only has 64 MiB per TensorCore).
    try:
        vmem_cap = pltpu.get_tpu_info().vmem_capacity_bytes
    except Exception:
        vmem_cap = 64 << 20  # conservative fallback (v7x per-TC)
    cbytes = jnp.dtype(compute_dtype).itemsize
    vmem_needed = (2 * tm * Fin * x_bytes
                   + 2 * tm * Fout * o_bytes
                   + 2 * (Fin * (fin_pad + Fout) + fin_pad * Fout) * cbytes
                   + 2 * (fin_pad + Fout) * 4)
    vmem_limit = int(min(max(4 * vmem_needed, 32 << 20), (vmem_cap * 3) // 4))

    kernel = functools.partial(gin_kernel, fin_pad=fin_pad,
                               compute_dtype=compute_dtype)

    # TODO(synk): for large Fin/Fout, single-buffer the grid-invariant weight
    # blocks (pipeline_mode=pl.Buffered(1)) and add a K-tiled "arbitrary" grid
    # axis with an f32 VMEM accumulator so the footprint stays inside v7x VMEM.
    return pl.pallas_call(
        kernel,
        out_shape=jax.ShapeDtypeStruct((N, Fout), out_dtype),
        grid_spec=pl.GridSpec(
            grid=grid,
            in_specs=[
                pl.BlockSpec((tm, Fin), lambda i: (i, 0)),               # x row tile
                pl.BlockSpec((Fin, fin_pad + Fout), lambda i: (0, 0)),   # [W1^T|pad|W2^T]
                pl.BlockSpec((1, fin_pad), lambda i: (0, 0)),            # b1 (padded)
                pl.BlockSpec((fin_pad, Fout), lambda i: (0, 0)),         # W2^T (padded K)
                pl.BlockSpec((1, Fout), lambda i: (0, 0)),               # b2
            ],
            out_specs=pl.BlockSpec((tm, Fout), lambda i: (i, 0)),
        ),
        compiler_params=pltpu.CompilerParams(
            dimension_semantics=("parallel",),
            vmem_limit_bytes=vmem_limit,
        ),
    )(x, w_pack, b1_row, w2_tp, b2_row)


def gin_reference_bf16(x, w1, b1, w2, b2, compute_dtype=jnp.bfloat16):
    """Reference with the same bf16-input / f32-accumulation recipe as the kernel."""
    xb = x.astype(compute_dtype)
    w1_t = w1.T.astype(compute_dtype)
    w2_t = w2.T.astype(compute_dtype)
    h = jnp.maximum(
        jnp.dot(xb, w1_t, preferred_element_type=jnp.float32) + b1.astype(jnp.float32),
        0.0)
    y = (jnp.dot(xb, w2_t, preferred_element_type=jnp.float32)
         + jnp.dot(h.astype(compute_dtype), w2_t, preferred_element_type=jnp.float32)
         + b2.astype(jnp.float32))
    return y.astype(x.dtype)


def gin_reference_f32(x, w1, b1, w2, b2):
    """Exact PyTorch-semantics reference in f32."""
    h = jnp.maximum(x @ w1.T + b1, 0.0)
    return (x + h) @ w2.T + b2


if __name__ == "__main__":
    # Small deterministic setup: N=256 rows, in_features=32, out_features=16.
    N, Fin, Fout = 256, 32, 16
    key = jax.random.PRNGKey(0)
    kx, kw1, kb1, kw2, kb2, kx2 = jax.random.split(key, 6)

    x = jax.random.normal(kx, (N, Fin), dtype=jnp.float32)

    # Mimic nn.Linear default init: U(-1/sqrt(fan_in), 1/sqrt(fan_in)).
    bound = 1.0 / jnp.sqrt(jnp.float32(Fin))
    w1 = jax.random.uniform(kw1, (Fin, Fin), minval=-bound, maxval=bound)
    b1 = jax.random.uniform(kb1, (Fin,), minval=-bound, maxval=bound)
    w2 = jax.random.uniform(kw2, (Fout, Fin), minval=-bound, maxval=bound)
    b2 = jax.random.uniform(kb2, (Fout,), minval=-bound, maxval=bound)

    out = jax.block_until_ready(gin_forward(x, w1, b1, w2, b2))
    assert out.shape == (N, Fout) and out.dtype == x.dtype

    # Tight check vs a reference using the same bf16/f32-accum recipe.
    ref_bf16 = gin_reference_bf16(x, w1, b1, w2, b2)
    assert jnp.allclose(out, ref_bf16, atol=5e-3, rtol=5e-3), "mismatch vs bf16 reference"

    # Loose semantic sanity check vs the exact f32 PyTorch forward.
    ref_f32 = gin_reference_f32(x, w1, b1, w2, b2)
    assert jnp.allclose(out, ref_f32, atol=1e-1, rtol=1e-1), "mismatch vs f32 reference"

    # Ragged row count: multi-step grid with a masked partial tail block
    # (no wrapper-side padding of x).
    N2 = 200
    x2 = jax.random.normal(kx2, (N2, Fin), dtype=jnp.float32)
    out2 = jax.block_until_ready(gin_forward(x2, w1, b1, w2, b2, tm=64))
    assert out2.shape == (N2, Fout)
    assert jnp.allclose(out2, gin_reference_bf16(x2, w1, b1, w2, b2),
                        atol=5e-3, rtol=5e-3), "mismatch on ragged-N path"

    print("KERNEL_OK")
</pallas_src>

<mosaic_0001>
module attributes {stable_mosaic.version = 11 : i64} {
  func.func @gin_kernel(%arg0: i32, %arg1: memref<256x32xf32, #tpu.memory_space<vmem>>, %arg2: memref<32x144xbf16, #tpu.memory_space<vmem>>, %arg3: memref<1x128xf32, #tpu.memory_space<vmem>>, %arg4: memref<128x16xbf16, #tpu.memory_space<vmem>>, %arg5: memref<1x16xf32, #tpu.memory_space<vmem>>, %arg6: memref<256x16xf32, #tpu.memory_space<vmem>>) attributes {dimension_semantics = [#tpu.dimension_semantics<parallel>], iteration_bounds = array<i64: 1>, scalar_prefetch = 0 : i64, scratch_operands = 0 : i64, tpu.core_type = #tpu.core_type<tc>, window_params = [{transform_indices = @transform_0, window_bounds = array<i64: 256, 32>}, {pipeline_mode = #tpu.pipeline_mode<synchronous>, transform_indices = @transform_1, window_bounds = array<i64: 32, 144>}, {pipeline_mode = #tpu.pipeline_mode<synchronous>, transform_indices = @transform_2, window_bounds = array<i64: 1, 128>}, {pipeline_mode = #tpu.pipeline_mode<synchronous>, transform_indices = @transform_3, window_bounds = array<i64: 128, 16>}, {pipeline_mode = #tpu.pipeline_mode<synchronous>, transform_indices = @transform_4, window_bounds = array<i64: 1, 16>}, {transform_indices = @transform_5, window_bounds = array<i64: 256, 16>}]} {
    %c0 = arith.constant 0 : index
    %c0_0 = arith.constant 0 : index
    %0 = vector.load %arg1[%c0, %c0_0] : memref<256x32xf32, #tpu.memory_space<vmem>>, vector<256x32xf32>
    %1 = arith.truncf %0 : vector<256x32xf32> to vector<256x32xbf16>
    %c0_1 = arith.constant 0 : index
    %c0_2 = arith.constant 0 : index
    %2 = vector.load %arg2[%c0_1, %c0_2] : memref<32x144xbf16, #tpu.memory_space<vmem>>, vector<32x144xbf16>
    %cst = arith.constant dense<0.000000e+00> : vector<256x144xf32>
    %3 = tpu.matmul %1, %2, %cst {dimension_numbers = #tpu.dot_dimension_numbers<[1], [0], [0], [1], [0, 0, 1, 1], [], []>} : vector<256x32xbf16>, vector<32x144xbf16>, vector<256x144xf32> -> vector<256x144xf32>
    %4 = vector.extract_strided_slice %3 {offsets = [0, 0], sizes = [256, 128], strides = [1, 1]} : vector<256x144xf32> to vector<256x128xf32>
    %5 = vector.extract_strided_slice %3 {offsets = [0, 128], sizes = [256, 16], strides = [1, 1]} : vector<256x144xf32> to vector<256x16xf32>
    %c0_3 = arith.constant 0 : index
    %c0_4 = arith.constant 0 : index
    %6 = vector.load %arg3[%c0_3, %c0_4] : memref<1x128xf32, #tpu.memory_space<vmem>>, vector<1x128xf32>
    %7 = vector.broadcast %6 : vector<1x128xf32> to vector<256x128xf32>
    %8 = arith.addf %4, %7 : vector<256x128xf32>
    %cst_5 = arith.constant 0.000000e+00 : f32
    %9 = vector.broadcast %cst_5 : f32 to vector<256x128xf32>
    %10 = arith.maximumf %8, %9 : vector<256x128xf32>
    %11 = arith.truncf %10 : vector<256x128xf32> to vector<256x128xbf16>
    %c0_6 = arith.constant 0 : index
    %c0_7 = arith.constant 0 : index
    %12 = vector.load %arg4[%c0_6, %c0_7] : memref<128x16xbf16, #tpu.memory_space<vmem>>, vector<128x16xbf16>
    %cst_8 = arith.constant dense<0.000000e+00> : vector<256x16xf32>
    %13 = tpu.matmul %11, %12, %cst_8 {dimension_numbers = #tpu.dot_dimension_numbers<[1], [0], [0], [1], [0, 0, 1, 1], [], []>} : vector<256x128xbf16>, vector<128x16xbf16>, vector<256x16xf32> -> vector<256x16xf32>
    %14 = arith.addf %5, %13 : vector<256x16xf32>
    %c0_9 = arith.constant 0 : index
    %c0_10 = arith.constant 0 : index
    %15 = vector.load %arg5[%c0_9, %c0_10] : memref<1x16xf32, #tpu.memory_space<vmem>>, vector<1x16xf32>
    %16 = vector.broadcast %15 : vector<1x16xf32> to vector<256x16xf32>
    %17 = arith.addf %14, %16 : vector<256x16xf32>
    %c0_11 = arith.constant 0 : index
    %c0_12 = arith.constant 0 : index
    %18 = vector.load %arg6[%c0_11, %c0_12] : memref<256x16xf32, #tpu.memory_space<vmem>>, vector<256x16xf32>
    tpu.vector_store %arg6[%c0_11, %c0_12], %17 {strides = array<i32>} : memref<256x16xf32, #tpu.memory_space<vmem>>, vector<256x16xf32>,
    return
  }
  func.func @transform_0(%arg0: i32) -> (i32, i32) {
    %c0_i32 = arith.constant 0 : i32
    %c0_i32_0 = arith.constant 0 : i32
    return %arg0, %c0_i32 : i32, i32
  }
  func.func @transform_1(%arg0: i32) -> (i32, i32) {
    %c0_i32 = arith.constant 0 : i32
    %c0_i32_0 = arith.constant 0 : i32
    %c0_i32_1 = arith.constant 0 : i32
    return %c0_i32, %c0_i32_0 : i32, i32
  }
  func.func @transform_2(%arg0: i32) -> (i32, i32) {
    %c0_i32 = arith.constant 0 : i32
    %c0_i32_0 = arith.constant 0 : i32
    %c0_i32_1 = arith.constant 0 : i32
    return %c0_i32, %c0_i32_0 : i32, i32
  }
  func.func @transform_3(%arg0: i32) -> (i32, i32) {
    %c0_i32 = arith.constant 0 : i32
    %c0_i32_0 = arith.constant 0 : i32
    %c0_i32_1 = arith.constant 0 : i32
    return %c0_i32, %c0_i32_0 : i32, i32
  }
  func.func @transform_4(%arg0: i32) -> (i32, i32) {
    %c0_i32 = arith.constant 0 : i32
    %c0_i32_0 = arith.constant 0 : i32
    %c0_i32_1 = arith.constant 0 : i32
    return %c0_i32, %c0_i32_0 : i32, i32
  }
  func.func @transform_5(%arg0: i32) -> (i32, i32) {
    %c0_i32 = arith.constant 0 : i32
    %c0_i32_0 = arith.constant 0 : i32
    return %arg0, %c0_i32 : i32, i32
  }
}

</mosaic_0001>

<llo_original>
// kernel: tpu_custom_call.1
$region0: #{tpu_custom_call.1}
  #allocation0 [shape = 'u32[]', space=smem, size = 0x4, offset = 0x4, fixed_abs, tag = 'smem constant byte address 0x4 - core index']
  #allocation1 [shape = 'u32[144,128]{1,0:T(1,128)}', space=vmem, size = 0x12000, scoped, tag = 'internal scratch']
  %s0 = inlined_call_operand.vmem [shape: f32[256,32], index: 0, kind: input, shape index: {}]
  %s1 = inlined_call_operand.vmem [shape: bf16[32,144], index: 1, kind: input, shape index: {}]
  %s2 = inlined_call_operand.vmem [shape: f32[1,128], index: 2, kind: input, shape index: {}]
  %s3 = inlined_call_operand.vmem [shape: bf16[128,16], index: 3, kind: input, shape index: {}]
  %s4 = inlined_call_operand.vmem [shape: f32[1,16], index: 4, kind: input, shape index: {}]
  %s5 = inlined_call_operand.vmem [shape: f32[256,16], index: 5, kind: output, shape index: {}]
  %s6 = sld [smem:[#allocation0]]
  $region30: #{tpu_custom_call.1} parent=0
    _
  %s8 = ssub.s32 1, %s6
  %s9 = scalar_select 0, %s8, %s6
  // Predicated region
  $region2: #{tpu_custom_call.1} parent=0 // pred_check
    _
  $region3: #{tpu_custom_call.1} parent=0 // pred_check_branch
    %11 = sbr.rel (0) target = $region5
  $region4: #{tpu_custom_call.1} parent=0 // pred_region
    _
  $region5: #{tpu_custom_call.1} parent=0 // pred_fallthru
    _
  // Predicated region
  $region6: #{tpu_custom_call.1} parent=0 // pred_check
    _
  $region7: #{tpu_custom_call.1} parent=0 // pred_check_branch
    %13 = sbr.rel (0) target = $region9
  $region8: #{tpu_custom_call.1} parent=0 // pred_region
    _
  $region9: #{tpu_custom_call.1} parent=0 // pred_fallthru
    _
  // Predicated region
  $region10: #{tpu_custom_call.1} parent=0 // pred_check
    _
  $region11: #{tpu_custom_call.1} parent=0 // pred_check_branch
    %15 = sbr.rel (0) target = $region13
  $region12: #{tpu_custom_call.1} parent=0 // pred_region
    _
  $region13: #{tpu_custom_call.1} parent=0 // pred_fallthru
    _
  // Predicated region
  $region14: #{tpu_custom_call.1} parent=0 // pred_check
    _
  $region15: #{tpu_custom_call.1} parent=0 // pred_check_branch
    %17 = sbr.rel (0) target = $region17
  $region16: #{tpu_custom_call.1} parent=0 // pred_region
    _
  $region17: #{tpu_custom_call.1} parent=0 // pred_fallthru
    _
  // Predicated region
  $region18: #{tpu_custom_call.1} parent=0 // pred_check
    _
  $region19: #{tpu_custom_call.1} parent=0 // pred_check_branch
    %19 = sbr.rel (0) target = $region21
  $region20: #{tpu_custom_call.1} parent=0 // pred_region
    _
  $region21: #{tpu_custom_call.1} parent=0 // pred_fallthru
    _
  %v21 = vld [vmem:[%s0] sm:$0xff]
  %v22 = vld [vmem:[%s0 + $0x8] sm:$0xff]
  %v23 = vld [vmem:[%s0 + $0x10] sm:$0xff]
  %v24 = vld [vmem:[%s0 + $0x18] sm:$0xff]
  %v25 = vld [vmem:[%s0 + $0x20] sm:$0xff]
  %v26 = vld [vmem:[%s0 + $0x28] sm:$0xff]
  %v27 = vld [vmem:[%s0 + $0x30] sm:$0xff]
  %v28 = vld [vmem:[%s0 + $0x38] sm:$0xff]
  %v29 = vld [vmem:[%s0 + $0x40] sm:$0xff]
  %v30 = vld [vmem:[%s0 + $0x48] sm:$0xff]
  %v31 = vld [vmem:[%s0 + $0x50] sm:$0xff]
  %v32 = vld [vmem:[%s0 + $0x58] sm:$0xff]
  %v33 = vld [vmem:[%s0 + $0x60] sm:$0xff]
  %v34 = vld [vmem:[%s0 + $0x68] sm:$0xff]
  %v35 = vld [vmem:[%s0 + $0x70] sm:$0xff]
  %v36 = vld [vmem:[%s0 + $0x78] sm:$0xff]
  %v37 = vld [vmem:[%s0 + $0x80] sm:$0xff]
  %v38 = vld [vmem:[%s0 + $0x88] sm:$0xff]
  %v39 = vld [vmem:[%s0 + $0x90] sm:$0xff]
  %v40 = vld [vmem:[%s0 + $0x98] sm:$0xff]
  %v41 = vld [vmem:[%s0 + $0xa0] sm:$0xff]
  %v42 = vld [vmem:[%s0 + $0xa8] sm:$0xff]
  %v43 = vld [vmem:[%s0 + $0xb0] sm:$0xff]
  %v44 = vld [vmem:[%s0 + $0xb8] sm:$0xff]
  %v45 = vld [vmem:[%s0 + $0xc0] sm:$0xff]
  %v46 = vld [vmem:[%s0 + $0xc8] sm:$0xff]
  %v47 = vld [vmem:[%s0 + $0xd0] sm:$0xff]
  %v48 = vld [vmem:[%s0 + $0xd8] sm:$0xff]
  %v49 = vld [vmem:[%s0 + $0xe0] sm:$0xff]
  %v50 = vld [vmem:[%s0 + $0xe8] sm:$0xff]
  %v51 = vld [vmem:[%s0 + $0xf0] sm:$0xff]
  %v52 = vld [vmem:[%s0 + $0xf8] sm:$0xff]
  %v53 = vpack.c.bf16 %v22, %v21
  %v54 = vpack.c.bf16 %v24, %v23
  %v55 = vpack.c.bf16 %v26, %v25
  %v56 = vpack.c.bf16 %v28, %v27
  %v57 = vpack.c.bf16 %v30, %v29
  %v58 = vpack.c.bf16 %v32, %v31
  %v59 = vpack.c.bf16 %v34, %v33
  %v60 = vpack.c.bf16 %v36, %v35
  %v61 = vpack.c.bf16 %v38, %v37
  %v62 = vpack.c.bf16 %v40, %v39
  %v63 = vpack.c.bf16 %v42, %v41
  %v64 = vpack.c.bf16 %v44, %v43
  %v65 = vpack.c.bf16 %v46, %v45
  %v66 = vpack.c.bf16 %v48, %v47
  %v67 = vpack.c.bf16 %v50, %v49
  %v68 = vpack.c.bf16 %v52, %v51
  %v69 = vld [vmem:[%s1] sm:$0xff]
  %v70 = vld [vmem:[%s1 + $0x8] sm:$0xff]
  %v71 = vld [vmem:[%s1 + $0x10] sm:$0xff]
  %v72 = vld [vmem:[%s1 + $0x18] sm:$0xff]
  %v77 = vunpack.c.l.b16 %v69
  %v78 = vunpack.c.h.b16 %v69
  %v79 = vunpack.c.l.b16 %v70
  %v80 = vunpack.c.h.b16 %v70
  %v81 = vunpack.c.l.b16 %v71
  %v82 = vunpack.c.h.b16 %v71
  %v83 = vunpack.c.l.b16 %v72
  %v84 = vunpack.c.h.b16 %v72
  %v85 = vpack.c.b16 %v79, %v77
  %v86 = vpack.c.b16 %v80, %v78
  %v87 = vpack.c.b16 %v83, %v81
  %v88 = vpack.c.b16 %v84, %v82
  %vm93 = vcmask 261120
  %v95 = vsel %vm93, %v53, 0
  %v98 = vsel %vm93, %v54, 0
  %v101 = vsel %vm93, %v55, 0
  %v104 = vsel %vm93, %v56, 0
  %v107 = vsel %vm93, %v57, 0
  %v110 = vsel %vm93, %v58, 0
  %v113 = vsel %vm93, %v59, 0
  %v116 = vsel %vm93, %v60, 0
  %v119 = vsel %vm93, %v61, 0
  %v122 = vsel %vm93, %v62, 0
  %v125 = vsel %vm93, %v63, 0
  %v128 = vsel %vm93, %v64, 0
  %v131 = vsel %vm93, %v65, 0
  %v134 = vsel %vm93, %v66, 0
  %v137 = vsel %vm93, %v67, 0
  %v140 = vsel %vm93, %v68, 0
  %142 = vmatprep.subr.bf16.mxu0 0
  %143 = vmatpush1.bf16.msra.mxu0 0
  %144 = vmatprep.subr.bf16.mxu0 0
  %145 = vmatpush1.bf16.msra.mxu0 0
  %146 = vmatprep.subr.bf16.mxu0 0
  %147 = vmatpush1.bf16.msra.mxu0 0
  %148 = vmatprep.subr.bf16.mxu0 0
  %149 = vmatpush1.bf16.msra.mxu0 0
  %150 = vmatprep.subr.bf16.mxu0 0
  %151 = vmatpush1.bf16.msra.mxu0 0
  %152 = vmatprep.subr.bf16.mxu0 0
  %153 = vmatpush1.bf16.msra.mxu0 0
  %154 = vmatprep.subr.bf16.mxu0 %v88
  %155 = vmatpush1.bf16.msra.mxu0 %v87
  %156 = vmatprep.subr.bf16.mxu0 %v86
  %157 = vmatpush1.bf16.msra.mxu0 %v85
  %158 = vmatprep.subr.bf16.mxu0 0
  %159 = vmatpush2.bf16.msra.mxu0 0
  %160 = vmatprep.subr.bf16.mxu0 0
  %161 = vmatpush2.bf16.msra.mxu0 0
  %162 = vmatprep.subr.bf16.mxu0 0
  %163 = vmatpush2.bf16.msra.mxu0 0
  %164 = vmatprep.subr.bf16.mxu0 0
  %165 = vmatpush2.bf16.msra.mxu0 0
  %166 = vmatprep.subr.bf16.mxu0 0
  %167 = vmatpush2.bf16.msra.mxu0 0
  %168 = vmatprep.subr.bf16.mxu0 0
  %169 = vmatpush2.bf16.msra.mxu0 0
  %170 = vmatprep.subr.bf16.mxu0 0
  %171 = vmatpush2.bf16.msra.mxu0 0
  %172 = vmatprep.subr.bf16.mxu0 0
  %173 = vmatpush2.bf16.msra.mxu0 0
  %174 = vmatprep.mubr.bf16.mxu0 0
  %175 = vmatmul.mubr.bf16.gmra.mxu0 %v95
  %v176 = vpop.f32.mrf.mxu0
  %v177 = vadd.f32 0.0, %v176
  %v178 = vpop.f32.mrf.mxu0
  %v179 = vadd.f32 0.0, %v178
  %v180 = vpop.f32.mrf.mxu0
  %v181 = vadd.f32 0.0, %v180
  %v182 = vpop.f32.mrf.mxu0
  %v183 = vadd.f32 0.0, %v182
  %184 = vmatprep.mubr.bf16.mxu0 0
  %185 = vmatmul.mubr.bf16.gmra.mxu0 %v98
  %v186 = vpop.f32.mrf.mxu0
  %v187 = vadd.f32 0.0, %v186
  %v188 = vpop.f32.mrf.mxu0
  %v189 = vadd.f32 0.0, %v188
  %v190 = vpop.f32.mrf.mxu0
  %v191 = vadd.f32 0.0, %v190
  %v192 = vpop.f32.mrf.mxu0
  %v193 = vadd.f32 0.0, %v192
  %194 = vmatprep.mubr.bf16.mxu0 0
  %195 = vmatmul.mubr.bf16.gmra.mxu0 %v101
  %v196 = vpop.f32.mrf.mxu0
  %v197 = vadd.f32 0.0, %v196
  %v198 = vpop.f32.mrf.mxu0
  %v199 = vadd.f32 0.0, %v198
  %v200 = vpop.f32.mrf.mxu0
  %v201 = vadd.f32 0.0, %v200
  %v202 = vpop.f32.mrf.mxu0
  %v203 = vadd.f32 0.0, %v202
  %204 = vmatprep.mubr.bf16.mxu0 0
  %205 = vmatmul.mubr.bf16.gmra.mxu0 %v104
  %v206 = vpop.f32.mrf.mxu0
  %v207 = vadd.f32 0.0, %v206
  %v208 = vpop.f32.mrf.mxu0
  %v209 = vadd.f32 0.0, %v208
  %v210 = vpop.f32.mrf.mxu0
  %v211 = vadd.f32 0.0, %v210
  %v212 = vpop.f32.mrf.mxu0
  %v213 = vadd.f32 0.0, %v212
  %214 = vmatprep.mubr.bf16.mxu0 0
  %215 = vmatmul.mubr.bf16.gmra.mxu0 %v107
  %v216 = vpop.f32.mrf.mxu0
  %v217 = vadd.f32 0.0, %v216
  %v218 = vpop.f32.mrf.mxu0
  %v219 = vadd.f32 0.0, %v218
  %v220 = vpop.f32.mrf.mxu0
  %v221 = vadd.f32 0.0, %v220
  %v222 = vpop.f32.mrf.mxu0
  %v223 = vadd.f32 0.0, %v222
  %224 = vmatprep.mubr.bf16.mxu0 0
  %225 = vmatmul.mubr.bf16.gmra.mxu0 %v110
  %v226 = vpop.f32.mrf.mxu0
  %v227 = vadd.f32 0.0, %v226
  %v228 = vpop.f32.mrf.mxu0
  %v229 = vadd.f32 0.0, %v228
  %v230 = vpop.f32.mrf.mxu0
  %v231 = vadd.f32 0.0, %v230
  %v232 = vpop.f32.mrf.mxu0
  %v233 = vadd.f32 0.0, %v232
  %234 = vmatprep.mubr.bf16.mxu0 0
  %235 = vmatmul.mubr.bf16.gmra.mxu0 %v113
  %v236 = vpop.f32.mrf.mxu0
  %v237 = vadd.f32 0.0, %v236
  %v238 = vpop.f32.mrf.mxu0
  %v239 = vadd.f32 0.0, %v238
  %v240 = vpop.f32.mrf.mxu0
  %v241 = vadd.f32 0.0, %v240
  %v242 = vpop.f32.mrf.mxu0
  %v243 = vadd.f32 0.0, %v242
  %244 = vmatprep.mubr.bf16.mxu0 0
  %245 = vmatmul.mubr.bf16.gmra.mxu0 %v116
  %v246 = vpop.f32.mrf.mxu0
  %v247 = vadd.f32 0.0, %v246
  %v248 = vpop.f32.mrf.mxu0
  %v249 = vadd.f32 0.0, %v248
  %v250 = vpop.f32.mrf.mxu0
  %v251 = vadd.f32 0.0, %v250
  %v252 = vpop.f32.mrf.mxu0
  %v253 = vadd.f32 0.0, %v252
  %254 = vmatprep.mubr.bf16.mxu0 0
  %255 = vmatmul.mubr.bf16.gmra.mxu0 %v119
  %v256 = vpop.f32.mrf.mxu0
  %v257 = vadd.f32 0.0, %v256
  %v258 = vpop.f32.mrf.mxu0
  %v259 = vadd.f32 0.0, %v258
  %v260 = vpop.f32.mrf.mxu0
  %v261 = vadd.f32 0.0, %v260
  %v262 = vpop.f32.mrf.mxu0
  %v263 = vadd.f32 0.0, %v262
  %264 = vmatprep.mubr.bf16.mxu0 0
  %265 = vmatmul.mubr.bf16.gmra.mxu0 %v122
  %v266 = vpop.f32.mrf.mxu0
  %v267 = vadd.f32 0.0, %v266
  %v268 = vpop.f32.mrf.mxu0
  %v269 = vadd.f32 0.0, %v268
  %v270 = vpop.f32.mrf.mxu0
  %v271 = vadd.f32 0.0, %v270
  %v272 = vpop.f32.mrf.mxu0
  %v273 = vadd.f32 0.0, %v272
  %274 = vmatprep.mubr.bf16.mxu0 0
  %275 = vmatmul.mubr.bf16.gmra.mxu0 %v125
  %v276 = vpop.f32.mrf.mxu0
  %v277 = vadd.f32 0.0, %v276
  %v278 = vpop.f32.mrf.mxu0
  %v279 = vadd.f32 0.0, %v278
  %v280 = vpop.f32.mrf.mxu0
  %v281 = vadd.f32 0.0, %v280
  %v282 = vpop.f32.mrf.mxu0
  %v283 = vadd.f32 0.0, %v282
  %284 = vmatprep.mubr.bf16.mxu0 0
  %285 = vmatmul.mubr.bf16.gmra.mxu0 %v128
  %v286 = vpop.f32.mrf.mxu0
  %v287 = vadd.f32 0.0, %v286
  %v288 = vpop.f32.mrf.mxu0
  %v289 = vadd.f32 0.0, %v288
  %v290 = vpop.f32.mrf.mxu0
  %v291 = vadd.f32 0.0, %v290
  %v292 = vpop.f32.mrf.mxu0
  %v293 = vadd.f32 0.0, %v292
  %294 = vmatprep.mubr.bf16.mxu0 0
  %295 = vmatmul.mubr.bf16.gmra.mxu0 %v131
  %v296 = vpop.f32.mrf.mxu0
  %v297 = vadd.f32 0.0, %v296
  %v298 = vpop.f32.mrf.mxu0
  %v299 = vadd.f32 0.0, %v298
  %v300 = vpop.f32.mrf.mxu0
  %v301 = vadd.f32 0.0, %v300
  %v302 = vpop.f32.mrf.mxu0
  %v303 = vadd.f32 0.0, %v302
  %304 = vmatprep.mubr.bf16.mxu0 0
  %305 = vmatmul.mubr.bf16.gmra.mxu0 %v134
  %v306 = vpop.f32.mrf.mxu0
  %v307 = vadd.f32 0.0, %v306
  %v308 = vpop.f32.mrf.mxu0
  %v309 = vadd.f32 0.0, %v308
  %v310 = vpop.f32.mrf.mxu0
  %v311 = vadd.f32 0.0, %v310
  %v312 = vpop.f32.mrf.mxu0
  %v313 = vadd.f32 0.0, %v312
  %314 = vmatprep.mubr.bf16.mxu0 0
  %315 = vmatmul.mubr.bf16.gmra.mxu0 %v137
  %v316 = vpop.f32.mrf.mxu0
  %v317 = vadd.f32 0.0, %v316
  %v318 = vpop.f32.mrf.mxu0
  %v319 = vadd.f32 0.0, %v318
  %v320 = vpop.f32.mrf.mxu0
  %v321 = vadd.f32 0.0, %v320
  %v322 = vpop.f32.mrf.mxu0
  %v323 = vadd.f32 0.0, %v322
  %324 = vmatprep.mubr.bf16.mxu0 0
  %325 = vmatmul.mubr.bf16.gmra.mxu0 %v140
  %v326 = vpop.f32.mrf.mxu0
  %v327 = vadd.f32 0.0, %v326
  %v328 = vpop.f32.mrf.mxu0
  %v329 = vadd.f32 0.0, %v328
  %v330 = vpop.f32.mrf.mxu0
  %v331 = vadd.f32 0.0, %v330
  %v332 = vpop.f32.mrf.mxu0
  %v333 = vadd.f32 0.0, %v332
  %334 = vdwg.mxu0
  %v335 = vld [vmem:[%s2] sm:$0x1]
  %v337 = vlaneseq
  %v338 = vshrl.u32 %v337, 7
  %v339 = vsub.s32 0, %v338
  %v340 = vrot.slane %v335, %v339
  %v342 = vadd.f32 %v177, %v340
  %v343 = vadd.f32 %v181, %v340
  %v344 = vadd.f32 %v187, %v340
  %v345 = vadd.f32 %v191, %v340
  %v346 = vadd.f32 %v197, %v340
  %v347 = vadd.f32 %v201, %v340
  %v348 = vadd.f32 %v207, %v340
  %v349 = vadd.f32 %v211, %v340
  %v350 = vadd.f32 %v217, %v340
  %v351 = vadd.f32 %v221, %v340
  %v352 = vadd.f32 %v227, %v340
  %v353 = vadd.f32 %v231, %v340
  %v354 = vadd.f32 %v237, %v340
  %v355 = vadd.f32 %v241, %v340
  %v356 = vadd.f32 %v247, %v340
  %v357 = vadd.f32 %v251, %v340
  %v358 = vadd.f32 %v257, %v340
  %v359 = vadd.f32 %v261, %v340
  %v360 = vadd.f32 %v267, %v340
  %v361 = vadd.f32 %v271, %v340
  %v362 = vadd.f32 %v277, %v340
  %v363 = vadd.f32 %v281, %v340
  %v364 = vadd.f32 %v287, %v340
  %v365 = vadd.f32 %v291, %v340
  %v366 = vadd.f32 %v297, %v340
  %v367 = vadd.f32 %v301, %v340
  %v368 = vadd.f32 %v307, %v340
  %v369 = vadd.f32 %v311, %v340
  %v370 = vadd.f32 %v317, %v340
  %v371 = vadd.f32 %v321, %v340
  %v372 = vadd.f32 %v327, %v340
  %v373 = vadd.f32 %v331, %v340
  %v374 = vmax.f32 %v342, 0.0
  %v375 = vmax.f32 %v343, 0.0
  %v376 = vmax.f32 %v344, 0.0
  %v377 = vmax.f32 %v345, 0.0
  %v378 = vmax.f32 %v346, 0.0
  %v379 = vmax.f32 %v347, 0.0
  %v380 = vmax.f32 %v348, 0.0
  %v381 = vmax.f32 %v349, 0.0
  %v382 = vmax.f32 %v350, 0.0
  %v383 = vmax.f32 %v351, 0.0
  %v384 = vmax.f32 %v352, 0.0
  %v385 = vmax.f32 %v353, 0.0
  %v386 = vmax.f32 %v354, 0.0
  %v387 = vmax.f32 %v355, 0.0
  %v388 = vmax.f32 %v356, 0.0
  %v389 = vmax.f32 %v357, 0.0
  %v390 = vmax.f32 %v358, 0.0
  %v391 = vmax.f32 %v359, 0.0
  %v392 = vmax.f32 %v360, 0.0
  %v393 = vmax.f32 %v361, 0.0
  %v394 = vmax.f32 %v362, 0.0
  %v395 = vmax.f32 %v363, 0.0
  %v396 = vmax.f32 %v364, 0.0
  %v397 = vmax.f32 %v365, 0.0
  %v398 = vmax.f32 %v366, 0.0
  %v399 = vmax.f32 %v367, 0.0
  %v400 = vmax.f32 %v368, 0.0
  %v401 = vmax.f32 %v369, 0.0
  %v402 = vmax.f32 %v370, 0.0
  %v403 = vmax.f32 %v371, 0.0
  %v404 = vmax.f32 %v372, 0.0
  %v405 = vmax.f32 %v373, 0.0
  %v406 = vpack.c.bf16 %v375, %v374
  %v407 = vpack.c.bf16 %v377, %v376
  %v408 = vpack.c.bf16 %v379, %v378
  %v409 = vpack.c.bf16 %v381, %v380
  %v410 = vpack.c.bf16 %v383, %v382
  %v411 = vpack.c.bf16 %v385, %v384
  %v412 = vpack.c.bf16 %v387, %v386
  %v413 = vpack.c.bf16 %v389, %v388
  %v414 = vpack.c.bf16 %v391, %v390
  %v415 = vpack.c.bf16 %v393, %v392
  %v416 = vpack.c.bf16 %v395, %v394
  %v417 = vpack.c.bf16 %v397, %v396
  %v418 = vpack.c.bf16 %v399, %v398
  %v419 = vpack.c.bf16 %v401, %v400
  %v420 = vpack.c.bf16 %v403, %v402
  %v421 = vpack.c.bf16 %v405, %v404
  %v422 = vld [vmem:[%s3] sm:$0xf]
  %v423 = vld [vmem:[%s3 + $0x4] sm:$0xf]
  %v424 = vld [vmem:[%s3 + $0x8] sm:$0xf]
  %v425 = vld [vmem:[%s3 + $0xc] sm:$0xf]
  %v426 = vld [vmem:[%s3 + $0x10] sm:$0xf]
  %v427 = vld [vmem:[%s3 + $0x14] sm:$0xf]
  %v428 = vld [vmem:[%s3 + $0x18] sm:$0xf]
  %v429 = vld [vmem:[%s3 + $0x1c] sm:$0xf]
  %v430 = vld [vmem:[%s3 + $0x20] sm:$0xf]
  %v431 = vld [vmem:[%s3 + $0x24] sm:$0xf]
  %v432 = vld [vmem:[%s3 + $0x28] sm:$0xf]
  %v433 = vld [vmem:[%s3 + $0x2c] sm:$0xf]
  %v434 = vld [vmem:[%s3 + $0x30] sm:$0xf]
  %v435 = vld [vmem:[%s3 + $0x34] sm:$0xf]
  %v436 = vld [vmem:[%s3 + $0x38] sm:$0xf]
  %v437 = vld [vmem:[%s3 + $0x3c] sm:$0xf]
  %v454 = vunpack.c.l.b16 %v422
  %v455 = vunpack.c.l.b16 %v423
  %v456 = vunpack.c.l.b16 %v424
  %v457 = vunpack.c.l.b16 %v425
  %v458 = vunpack.c.l.b16 %v426
  %v459 = vunpack.c.l.b16 %v427
  %v460 = vunpack.c.l.b16 %v428
  %v461 = vunpack.c.l.b16 %v429
  %v462 = vunpack.c.l.b16 %v430
  %v463 = vunpack.c.l.b16 %v431
  %v464 = vunpack.c.l.b16 %v432
  %v465 = vunpack.c.l.b16 %v433
  %v466 = vunpack.c.l.b16 %v434
  %v467 = vunpack.c.l.b16 %v435
  %v468 = vunpack.c.l.b16 %v436
  %v469 = vunpack.c.l.b16 %v437
  %v470 = vpack.c.b16 %v455, %v454
  %v471 = vpack.c.b16 %v457, %v456
  %v472 = vpack.c.b16 %v459, %v458
  %v473 = vpack.c.b16 %v461, %v460
  %v474 = vpack.c.b16 %v463, %v462
  %v475 = vpack.c.b16 %v465, %v464
  %v476 = vpack.c.b16 %v467, %v466
  %v477 = vpack.c.b16 %v469, %v468
  %486 = vmatprep.subr.bf16.mxu0 0
  %487 = vmatpush1.bf16.msra.mxu0 %v477
  %488 = vmatprep.subr.bf16.mxu0 0
  %489 = vmatpush1.bf16.msra.mxu0 %v476
  %490 = vmatprep.subr.bf16.mxu0 0
  %491 = vmatpush1.bf16.msra.mxu0 %v475
  %492 = vmatprep.subr.bf16.mxu0 0
  %493 = vmatpush1.bf16.msra.mxu0 %v474
  %494 = vmatprep.subr.bf16.mxu0 0
  %495 = vmatpush1.bf16.msra.mxu0 %v473
  %496 = vmatprep.subr.bf16.mxu0 0
  %497 = vmatpush1.bf16.msra.mxu0 %v472
  %498 = vmatprep.subr.bf16.mxu0 0
  %499 = vmatpush1.bf16.msra.mxu0 %v471
  %500 = vmatprep.subr.bf16.mxu0 0
  %501 = vmatpush1.bf16.msra.mxu0 %v470
  %502 = vmatprep.subr.bf16.mxu0 0
  %503 = vmatpush2.bf16.msra.mxu0 0
  %504 = vmatprep.subr.bf16.mxu0 0
  %505 = vmatpush2.bf16.msra.mxu0 0
  %506 = vmatprep.subr.bf16.mxu0 0
  %507 = vmatpush2.bf16.msra.mxu0 0
  %508 = vmatprep.subr.bf16.mxu0 0
  %509 = vmatpush2.bf16.msra.mxu0 0
  %510 = vmatprep.subr.bf16.mxu0 0
  %511 = vmatpush2.bf16.msra.mxu0 0
  %512 = vmatprep.subr.bf16.mxu0 0
  %513 = vmatpush2.bf16.msra.mxu0 0
  %514 = vmatprep.subr.bf16.mxu0 0
  %515 = vmatpush2.bf16.msra.mxu0 0
  %516 = vmatprep.subr.bf16.mxu0 0
  %517 = vmatpush2.bf16.msra.mxu0 0
  %518 = vmatprep.mubr.bf16.mxu0 0
  %519 = vmatmul.mubr.bf16.gmra.mxu0 %v406
  %v520 = vpop.f32.mrf.mxu0
  %v521 = vadd.f32 0.0, %v520
  %v522 = vpop.f32.mrf.mxu0
  %v523 = vpop.f32.mrf.mxu0
  %v524 = vadd.f32 0.0, %v523
  %v525 = vpop.f32.mrf.mxu0
  %526 = vmatprep.mubr.bf16.mxu0 0
  %527 = vmatmul.mubr.bf16.gmra.mxu0 %v407
  %v528 = vpop.f32.mrf.mxu0
  %v529 = vadd.f32 0.0, %v528
  %v530 = vpop.f32.mrf.mxu0
  %v531 = vpop.f32.mrf.mxu0
  %v532 = vadd.f32 0.0, %v531
  %v533 = vpop.f32.mrf.mxu0
  %534 = vmatprep.mubr.bf16.mxu0 0
  %535 = vmatmul.mubr.bf16.gmra.mxu0 %v408
  %v536 = vpop.f32.mrf.mxu0
  %v537 = vadd.f32 0.0, %v536
  %v538 = vpop.f32.mrf.mxu0
  %v539 = vpop.f32.mrf.mxu0
  %v540 = vadd.f32 0.0, %v539
  %v541 = vpop.f32.mrf.mxu0
  %542 = vmatprep.mubr.bf16.mxu0 0
  %543 = vmatmul.mubr.bf16.gmra.mxu0 %v409
  %v544 = vpop.f32.mrf.mxu0
  %v545 = vadd.f32 0.0, %v544
  %v546 = vpop.f32.mrf.mxu0
  %v547 = vpop.f32.mrf.mxu0
  %v548 = vadd.f32 0.0, %v547
  %v549 = vpop.f32.mrf.mxu0
  %550 = vmatprep.mubr.bf16.mxu0 0
  %551 = vmatmul.mubr.bf16.gmra.mxu0 %v410
  %v552 = vpop.f32.mrf.mxu0
  %v553 = vadd.f32 0.0, %v552
  %v554 = vpop.f32.mrf.mxu0
  %v555 = vpop.f32.mrf.mxu0
  %v556 = vadd.f32 0.0, %v555
  %v557 = vpop.f32.mrf.mxu0
  %558 = vmatprep.mubr.bf16.mxu0 0
  %559 = vmatmul.mubr.bf16.gmra.mxu0 %v411
  %v560 = vpop.f32.mrf.mxu0
  %v561 = vadd.f32 0.0, %v560
  %v562 = vpop.f32.mrf.mxu0
  %v563 = vpop.f32.mrf.mxu0
  %v564 = vadd.f32 0.0, %v563
  %v565 = vpop.f32.mrf.mxu0
  %566 = vmatprep.mubr.bf16.mxu0 0
  %567 = vmatmul.mubr.bf16.gmra.mxu0 %v412
  %v568 = vpop.f32.mrf.mxu0
  %v569 = vadd.f32 0.0, %v568
  %v570 = vpop.f32.mrf.mxu0
  %v571 = vpop.f32.mrf.mxu0
  %v572 = vadd.f32 0.0, %v571
  %v573 = vpop.f32.mrf.mxu0
  %574 = vmatprep.mubr.bf16.mxu0 0
  %575 = vmatmul.mubr.bf16.gmra.mxu0 %v413
  %v576 = vpop.f32.mrf.mxu0
  %v577 = vadd.f32 0.0, %v576
  %v578 = vpop.f32.mrf.mxu0
  %v579 = vpop.f32.mrf.mxu0
  %v580 = vadd.f32 0.0, %v579
  %v581 = vpop.f32.mrf.mxu0
  %582 = vmatprep.mubr.bf16.mxu0 0
  %583 = vmatmul.mubr.bf16.gmra.mxu0 %v414
  %v584 = vpop.f32.mrf.mxu0
  %v585 = vadd.f32 0.0, %v584
  %v586 = vpop.f32.mrf.mxu0
  %v587 = vpop.f32.mrf.mxu0
  %v588 = vadd.f32 0.0, %v587
  %v589 = vpop.f32.mrf.mxu0
  %590 = vmatprep.mubr.bf16.mxu0 0
  %591 = vmatmul.mubr.bf16.gmra.mxu0 %v415
  %v592 = vpop.f32.mrf.mxu0
  %v593 = vadd.f32 0.0, %v592
  %v594 = vpop.f32.mrf.mxu0
  %v595 = vpop.f32.mrf.mxu0
  %v596 = vadd.f32 0.0, %v595
  %v597 = vpop.f32.mrf.mxu0
  %598 = vmatprep.mubr.bf16.mxu0 0
  %599 = vmatmul.mubr.bf16.gmra.mxu0 %v416
  %v600 = vpop.f32.mrf.mxu0
  %v601 = vadd.f32 0.0, %v600
  %v602 = vpop.f32.mrf.mxu0
  %v603 = vpop.f32.mrf.mxu0
  %v604 = vadd.f32 0.0, %v603
  %v605 = vpop.f32.mrf.mxu0
  %606 = vmatprep.mubr.bf16.mxu0 0
  %607 = vmatmul.mubr.bf16.gmra.mxu0 %v417
  %v608 = vpop.f32.mrf.mxu0
  %v609 = vadd.f32 0.0, %v608
  %v610 = vpop.f32.mrf.mxu0
  %v611 = vpop.f32.mrf.mxu0
  %v612 = vadd.f32 0.0, %v611
  %v613 = vpop.f32.mrf.mxu0
  %614 = vmatprep.mubr.bf16.mxu0 0
  %615 = vmatmul.mubr.bf16.gmra.mxu0 %v418
  %v616 = vpop.f32.mrf.mxu0
  %v617 = vadd.f32 0.0, %v616
  %v618 = vpop.f32.mrf.mxu0
  %v619 = vpop.f32.mrf.mxu0
  %v620 = vadd.f32 0.0, %v619
  %v621 = vpop.f32.mrf.mxu0
  %622 = vmatprep.mubr.bf16.mxu0 0
  %623 = vmatmul.mubr.bf16.gmra.mxu0 %v419
  %v624 = vpop.f32.mrf.mxu0
  %v625 = vadd.f32 0.0, %v624
  %v626 = vpop.f32.mrf.mxu0
  %v627 = vpop.f32.mrf.mxu0
  %v628 = vadd.f32 0.0, %v627
  %v629 = vpop.f32.mrf.mxu0
  %630 = vmatprep.mubr.bf16.mxu0 0
  %631 = vmatmul.mubr.bf16.gmra.mxu0 %v420
  %v632 = vpop.f32.mrf.mxu0
  %v633 = vadd.f32 0.0, %v632
  %v634 = vpop.f32.mrf.mxu0
  %v635 = vpop.f32.mrf.mxu0
  %v636 = vadd.f32 0.0, %v635
  %v637 = vpop.f32.mrf.mxu0
  %638 = vmatprep.mubr.bf16.mxu0 0
  %639 = vmatmul.mubr.bf16.gmra.mxu0 %v421
  %v640 = vpop.f32.mrf.mxu0
  %v641 = vadd.f32 0.0, %v640
  %v642 = vpop.f32.mrf.mxu0
  %v643 = vpop.f32.mrf.mxu0
  %v644 = vadd.f32 0.0, %v643
  %v645 = vpop.f32.mrf.mxu0
  %646 = vdwg.mxu0
  %v647 = vadd.f32 %v179, %v521
  %v648 = vadd.f32 %v183, %v524
  %v649 = vadd.f32 %v189, %v529
  %v650 = vadd.f32 %v193, %v532
  %v651 = vadd.f32 %v199, %v537
  %v652 = vadd.f32 %v203, %v540
  %v653 = vadd.f32 %v209, %v545
  %v654 = vadd.f32 %v213, %v548
  %v655 = vadd.f32 %v219, %v553
  %v656 = vadd.f32 %v223, %v556
  %v657 = vadd.f32 %v229, %v561
  %v658 = vadd.f32 %v233, %v564
  %v659 = vadd.f32 %v239, %v569
  %v660 = vadd.f32 %v243, %v572
  %v661 = vadd.f32 %v249, %v577
  %v662 = vadd.f32 %v253, %v580
  %v663 = vadd.f32 %v259, %v585
  %v664 = vadd.f32 %v263, %v588
  %v665 = vadd.f32 %v269, %v593
  %v666 = vadd.f32 %v273, %v596
  %v667 = vadd.f32 %v279, %v601
  %v668 = vadd.f32 %v283, %v604
  %v669 = vadd.f32 %v289, %v609
  %v670 = vadd.f32 %v293, %v612
  %v671 = vadd.f32 %v299, %v617
  %v672 = vadd.f32 %v303, %v620
  %v673 = vadd.f32 %v309, %v625
  %v674 = vadd.f32 %v313, %v628
  %v675 = vadd.f32 %v319, %v633
  %v676 = vadd.f32 %v323, %v636
  %v677 = vadd.f32 %v329, %v641
  %v678 = vadd.f32 %v333, %v644
  %v679 = vld [vmem:[%s4] sm:$0x1]
  %v681 = vlaneseq
  %v682 = vshrl.u32 %v681, 7
  %v683 = vsub.s32 0, %v682
  %v684 = vrot.slane %v679, %v683
  %v686 = vadd.f32 %v647, %v684
  %v687 = vadd.f32 %v648, %v684
  %v688 = vadd.f32 %v649, %v684
  %v689 = vadd.f32 %v650, %v684
  %v690 = vadd.f32 %v651, %v684
  %v691 = vadd.f32 %v652, %v684
  %v692 = vadd.f32 %v653, %v684
  %v693 = vadd.f32 %v654, %v684
  %v694 = vadd.f32 %v655, %v684
  %v695 = vadd.f32 %v656, %v684
  %v696 = vadd.f32 %v657, %v684
  %v697 = vadd.f32 %v658, %v684
  %v698 = vadd.f32 %v659, %v684
  %v699 = vadd.f32 %v660, %v684
  %v700 = vadd.f32 %v661, %v684
  %v701 = vadd.f32 %v662, %v684
  %v702 = vadd.f32 %v663, %v684
  %v703 = vadd.f32 %v664, %v684
  %v704 = vadd.f32 %v665, %v684
  %v705 = vadd.f32 %v666, %v684
  %v706 = vadd.f32 %v667, %v684
  %v707 = vadd.f32 %v668, %v684
  %v708 = vadd.f32 %v669, %v684
  %v709 = vadd.f32 %v670, %v684
  %v710 = vadd.f32 %v671, %v684
  %v711 = vadd.f32 %v672, %v684
  %v712 = vadd.f32 %v673, %v684
  %v713 = vadd.f32 %v674, %v684
  %v714 = vadd.f32 %v675, %v684
  %v715 = vadd.f32 %v676, %v684
  %v716 = vadd.f32 %v677, %v684
  %v717 = vadd.f32 %v678, %v684
  %vm718 = vcmask 130048
  %719 = vst.msk [vmem:[%s5] sm:$0xff] %vm718, %v686
  %720 = vst.msk [vmem:[%s5 + $0x8] sm:$0xff] %vm718, %v687
  %721 = vst.msk [vmem:[%s5 + $0x10] sm:$0xff] %vm718, %v688
  %722 = vst.msk [vmem:[%s5 + $0x18] sm:$0xff] %vm718, %v689
  %723 = vst.msk [vmem:[%s5 + $0x20] sm:$0xff] %vm718, %v690
  %724 = vst.msk [vmem:[%s5 + $0x28] sm:$0xff] %vm718, %v691
  %725 = vst.msk [vmem:[%s5 + $0x30] sm:$0xff] %vm718, %v692
  %726 = vst.msk [vmem:[%s5 + $0x38] sm:$0xff] %vm718, %v693
  %727 = vst.msk [vmem:[%s5 + $0x40] sm:$0xff] %vm718, %v694
  %728 = vst.msk [vmem:[%s5 + $0x48] sm:$0xff] %vm718, %v695
  %729 = vst.msk [vmem:[%s5 + $0x50] sm:$0xff] %vm718, %v696
  %730 = vst.msk [vmem:[%s5 + $0x58] sm:$0xff] %vm718, %v697
  %731 = vst.msk [vmem:[%s5 + $0x60] sm:$0xff] %vm718, %v698
  %732 = vst.msk [vmem:[%s5 + $0x68] sm:$0xff] %vm718, %v699
  %733 = vst.msk [vmem:[%s5 + $0x70] sm:$0xff] %vm718, %v700
  %734 = vst.msk [vmem:[%s5 + $0x78] sm:$0xff] %vm718, %v701
  %735 = vst.msk [vmem:[%s5 + $0x80] sm:$0xff] %vm718, %v702
  %736 = vst.msk [vmem:[%s5 + $0x88] sm:$0xff] %vm718, %v703
  %737 = vst.msk [vmem:[%s5 + $0x90] sm:$0xff] %vm718, %v704
  %738 = vst.msk [vmem:[%s5 + $0x98] sm:$0xff] %vm718, %v705
  %739 = vst.msk [vmem:[%s5 + $0xa0] sm:$0xff] %vm718, %v706
  %740 = vst.msk [vmem:[%s5 + $0xa8] sm:$0xff] %vm718, %v707
  %741 = vst.msk [vmem:[%s5 + $0xb0] sm:$0xff] %vm718, %v708
  %742 = vst.msk [vmem:[%s5 + $0xb8] sm:$0xff] %vm718, %v709
  %743 = vst.msk [vmem:[%s5 + $0xc0] sm:$0xff] %vm718, %v710
  %744 = vst.msk [vmem:[%s5 + $0xc8] sm:$0xff] %vm718, %v711
  %745 = vst.msk [vmem:[%s5 + $0xd0] sm:$0xff] %vm718, %v712
  %746 = vst.msk [vmem:[%s5 + $0xd8] sm:$0xff] %vm718, %v713
  %747 = vst.msk [vmem:[%s5 + $0xe0] sm:$0xff] %vm718, %v714
  %748 = vst.msk [vmem:[%s5 + $0xe8] sm:$0xff] %vm718, %v715
  %749 = vst.msk [vmem:[%s5 + $0xf0] sm:$0xff] %vm718, %v716
  %750 = vst.msk [vmem:[%s5 + $0xf8] sm:$0xff] %vm718, %v717
  // Predicated region
  $region22: #{tpu_custom_call.1} parent=0 // pred_check
    _
  $region23: #{tpu_custom_call.1} parent=0 // pred_check_branch
    %752 = sbr.rel (0) target = $region25
  $region24: #{tpu_custom_call.1} parent=0 // pred_region
    _
  $region25: #{tpu_custom_call.1} parent=0 // pred_fallthru
    _
  // Predicated region
  $region26: #{tpu_custom_call.1} parent=0 // pred_check
    _
  $region27: #{tpu_custom_call.1} parent=0 // pred_check_branch
    %754 = sbr.rel (0) target = $region29
  $region28: #{tpu_custom_call.1} parent=0 // pred_region
    _
  $region29: #{tpu_custom_call.1} parent=0 // pred_fallthru
    _

</llo_original>
